<compile_context>
chip_gen: v5e
topology: v5e:2x2
jax: 0.10.0
libtpu: 0.0.40
codegen_flags: <defaults>
</compile_context>

<pallas_src>
import functools

import jax
import jax.numpy as jnp
from jax import lax
from jax.experimental import pallas as pl
from jax.experimental.pallas import tpu as pltpu


def _rbf_kernel(inv_ref, xr_ref, xc_ref, nc_ref, out_ref, *, tn, n_kernels, pow_base):
    # inv_ref: SMEM (n_kernels,) f32  -- precomputed 1 / (bandwidth * multiplier_k)
    # xr_ref:  VMEM (tm, D)           -- row tile of X (resident across the inner j axis)
    # xc_ref:  VMEM (tn, D)           -- column tile of X
    # nc_ref:  VMEM (1, Npad_c) f32   -- ALL column squared norms, resident (index (0,0))
    # out_ref: VMEM (tm, tn) f32      -- summed RBF kernel tile
    xr = xr_ref[...]
    xc = xc_ref[...]

    # Gram tile on the MXU in the input dtype (bf16 stays bf16), f32 accumulator.
    # Contract dim 1 of both operands so no in-kernel transpose of the RHS tile.
    gram = lax.dot_general(
        xr, xc,
        dimension_numbers=(((1,), (1,)), ((), ())),
        preferred_element_type=jnp.float32,
    )                                                        # (tm, tn)

    # Row squared norms computed in-kernel (lane-reduce is cheap; xr is resident anyway).
    xr32 = xr.astype(jnp.float32)
    nr = jnp.sum(xr32 * xr32, axis=-1, keepdims=True)        # (tm, 1)

    # Slice the resident column-norm vector for this tile (128-aligned lane offset).
    col_off = pl.multiple_of(pl.program_id(1) * tn, tn)
    nc = nc_ref[:, pl.ds(col_off, tn)]                       # (1, tn)

    # ||xi - xj||^2 = ||xi||^2 + ||xj||^2 - 2 <xi, xj>.  No clamp (reference doesn't clamp;
    # a slightly-negative l2 just gives exp marginally > 1).
    l2 = nr + nc - 2.0 * gram

    if pow_base is not None:
        # multipliers are m^{k - n//2} with integer m: the widest kernel (largest
        # multiplier) is k = n-1 and exp(-l2*inv_k) = base^(m^(n-1-k)) with
        # base = exp(-l2*inv_{n-1}); so 1 EUP exp + short VPU multiply chain.
        base = jnp.exp(-l2 * inv_ref[n_kernels - 1])
        acc = base
        t = base
        for _ in range(n_kernels - 1):
            t = lax.integer_pow(t, pow_base)
            acc = acc + t
    else:
        # General multipliers: one exp per kernel, scale factors precomputed in SMEM.
        acc = jnp.exp(-l2 * inv_ref[0])
        for k in range(1, n_kernels):
            acc = acc + jnp.exp(-l2 * inv_ref[k])

    out_ref[...] = acc


def _round_up(a, b):
    return ((a + b - 1) // b) * b


def rbf_forward(x, n_kernels=5, mul_factor=2.0, bandwidth=None, tm=None, tn=None):
    """x: (N, D) array. Returns the (N, N) float32 summed-RBF kernel matrix."""
    N, D = x.shape
    isize = jnp.dtype(x.dtype).itemsize

    # --- tile selection: big lane-dense tiles for large N, tight tiles for small N ------
    if tm is None:
        tm = _round_up(min(N, 256), 8)
    if tn is None:
        tn = _round_up(min(N, 512), 128)
    assert tm % 8 == 0 and tn % 128 == 0, "tiles must be sublane/lane aligned"

    # VMEM budget: double-buffered X tiles + double-buffered output tile + resident norms.
    def vmem_est(tm_, tn_):
        return (2 * (tm_ + tn_) * D * isize
                + 2 * tm_ * tn_ * 4
                + 2 * 8 * _round_up(N, tn_) * 4)

    VMEM_BUDGET = 48 << 20  # safe on v5e/v6e (128 MiB) and v7x (64 MiB physical)
    while vmem_est(tm, tn) > VMEM_BUDGET and (tn > 128 or tm > 8):
        if tn > 128:
            tn = max(128, (tn // 2) // 128 * 128)
        else:
            tm = max(8, (tm // 2) // 8 * 8)
    vmem_limit = int(min(VMEM_BUDGET, max(32 << 20, int(1.5 * vmem_est(tm, tn)))))

    # --- wrapper-side O(N*D) prologue: norms, closed-form bandwidth, scale factors -------
    multipliers = mul_factor ** (
        jnp.arange(n_kernels, dtype=jnp.float32) - (n_kernels // 2)
    )
    x32 = x.astype(jnp.float32)
    sqn = jnp.sum(x32 * x32, axis=-1)                         # (N,)  uncentered, for kernel
    if bandwidth is None:
        # Translation invariance: sum(L2) = 2*N*sum_i||x_i - mean||^2 (no cancellation).
        mu = jnp.mean(x32, axis=0)
        xc_ = x32 - mu
        sum_l2 = 2.0 * jnp.float32(N) * jnp.sum(xc_ * xc_)
        bw = sum_l2 / jnp.float32(N * N - N)
    else:
        bw = jnp.asarray(bandwidth, jnp.float32)
    inv_scales = (1.0 / (bw * multipliers)).astype(jnp.float32)   # (n_kernels,)

    # --- independent row/column padding (slice copy only if padding occurred) ------------
    Npad_r = _round_up(N, tm)
    Npad_c = _round_up(N, tn)
    Npad_x = max(Npad_r, Npad_c)
    x_pad = jnp.pad(x, ((0, Npad_x - N), (0, 0))) if Npad_x > N else x
    sqn_col = jnp.pad(sqn, (0, Npad_c - N)).reshape(1, Npad_c)

    # --- pow-chain applicability: integer multiplier with bounded exponent growth ---------
    mf = float(mul_factor)
    use_chain = mf.is_integer() and mf >= 1.0 and (int(mf) ** max(n_kernels - 1, 0)) <= 256
    pow_base = int(mf) if use_chain else None

    kernel = functools.partial(
        _rbf_kernel, tn=tn, n_kernels=n_kernels, pow_base=pow_base,
    )

    grid = (Npad_r // tm, Npad_c // tn)
    grid_spec = pltpu.PrefetchScalarGridSpec(
        num_scalar_prefetch=1,                                # inv_scales -> SMEM
        grid=grid,
        in_specs=[
            pl.BlockSpec((tm, D), lambda i, j, inv: (i, 0)),        # X row tile
            pl.BlockSpec((tn, D), lambda i, j, inv: (j, 0)),        # X column tile
            pl.BlockSpec((1, Npad_c), lambda i, j, inv: (0, 0)),    # resident col sq-norms
        ],
        out_specs=pl.BlockSpec((tm, tn), lambda i, j, inv: (i, j)),
    )

    n_exp = 1 if pow_base is not None else n_kernels
    cost = pl.CostEstimate(
        flops=int(2 * Npad_r * Npad_c * D + 12 * Npad_r * Npad_c),
        transcendentals=int(n_exp * Npad_r * Npad_c),
        bytes_accessed=int(4 * Npad_r * Npad_c
                           + grid[0] * Npad_c * D * isize
                           + Npad_r * D * isize
                           + 4 * Npad_c),
    )

    out = pl.pallas_call(
        kernel,
        out_shape=jax.ShapeDtypeStruct((Npad_r, Npad_c), jnp.float32),
        grid_spec=grid_spec,
        compiler_params=pltpu.CompilerParams(
            dimension_semantics=("parallel", "parallel"),
            vmem_limit_bytes=vmem_limit,
        ),
        cost_estimate=cost,
    )(inv_scales, x_pad, x_pad, sqn_col)

    if Npad_r > N or Npad_c > N:
        out = out[:N, :N]
    return out


def _rbf_reference(x, n_kernels=5, mul_factor=2.0, bandwidth=None):
    x = x.astype(jnp.float32)
    multipliers = mul_factor ** (
        jnp.arange(n_kernels, dtype=jnp.float32) - (n_kernels // 2)
    )
    diff = x[:, None, :] - x[None, :, :]
    l2 = jnp.sum(diff * diff, axis=-1)
    n = x.shape[0]
    bw = jnp.sum(l2) / (n * n - n) if bandwidth is None else jnp.float32(bandwidth)
    return jnp.sum(
        jnp.exp(-l2[None, ...] / (bw * multipliers)[:, None, None]), axis=0
    )


if __name__ == "__main__":
    key = jax.random.PRNGKey(0)
    N, D = 200, 32  # MMD-style batch of feature vectors
    # Non-zero mean exercises the centered (cancellation-free) closed-form bandwidth.
    x = jax.random.normal(key, (N, D), dtype=jnp.float32) + 0.5

    # Fast path (mul_factor=2 -> 1 exp + repeated squaring).
    out = jax.block_until_ready(rbf_forward(x))
    ref = _rbf_reference(x)
    assert out.shape == (N, N) and out.dtype == jnp.float32
    assert jnp.allclose(out, ref, atol=2e-4, rtol=2e-4), "mismatch (mul_factor=2)"

    # Integer pow-chain path for mul_factor=3 (1 exp + cubing chain).
    out3 = jax.block_until_ready(rbf_forward(x, mul_factor=3.0))
    ref3 = _rbf_reference(x, mul_factor=3.0)
    assert jnp.allclose(out3, ref3, atol=2e-4, rtol=2e-4), "mismatch (mul_factor=3)"

    # General (non-integer) multiplier fallback path: one exp per kernel.
    outg = jax.block_until_ready(rbf_forward(x, mul_factor=2.5))
    refg = _rbf_reference(x, mul_factor=2.5)
    assert jnp.allclose(outg, refg, atol=2e-4, rtol=2e-4), "mismatch (mul_factor=2.5)"

    print("KERNEL_OK")
</pallas_src>

<mosaic_0001>
module attributes {stable_mosaic.version = 11 : i64} {
  func.func @_rbf_kernel(%arg0: i32, %arg1: i32, %arg2: memref<5xf32, #tpu.memory_space<smem>>, %arg3: memref<200x32xf32, #tpu.memory_space<vmem>>, %arg4: memref<256x32xf32, #tpu.memory_space<vmem>>, %arg5: memref<1x256xf32, #tpu.memory_space<vmem>>, %arg6: memref<200x256xf32, #tpu.memory_space<vmem>>) attributes {dimension_semantics = [#tpu.dimension_semantics<parallel>, #tpu.dimension_semantics<parallel>], iteration_bounds = array<i64: 1, 1>, scalar_prefetch = 1 : i64, scratch_operands = 0 : i64, tpu.core_type = #tpu.core_type<tc>, window_params = [{transform_indices = @transform_0, window_bounds = array<i64: 200, 32>}, {transform_indices = @transform_1, window_bounds = array<i64: 256, 32>}, {pipeline_mode = #tpu.pipeline_mode<synchronous>, transform_indices = @transform_2, window_bounds = array<i64: 1, 256>}, {transform_indices = @transform_3, window_bounds = array<i64: 200, 256>}]} {
    %c0 = arith.constant 0 : index
    %c0_0 = arith.constant 0 : index
    %0 = vector.load %arg3[%c0, %c0_0] : memref<200x32xf32, #tpu.memory_space<vmem>>, vector<200x32xf32>
    %c0_1 = arith.constant 0 : index
    %c0_2 = arith.constant 0 : index
    %1 = vector.load %arg4[%c0_1, %c0_2] : memref<256x32xf32, #tpu.memory_space<vmem>>, vector<256x32xf32>
    %cst = arith.constant dense<0.000000e+00> : vector<200x256xf32>
    %2 = tpu.matmul %0, %1, %cst {dimension_numbers = #tpu.dot_dimension_numbers<[1], [1], [0], [0], [0, 0, 1, 0], [], []>} : vector<200x32xf32>, vector<256x32xf32>, vector<200x256xf32> -> vector<200x256xf32>
    %3 = arith.mulf %0, %0 : vector<200x32xf32>
    %cst_3 = arith.constant dense<0.000000e+00> : vector<200xf32>
    %4 = vector.multi_reduction <add>, %3, %cst_3 [1] : vector<200x32xf32> to vector<200xf32>
    %5 = vector.shape_cast %4 : vector<200xf32> to vector<200x1xf32>
    %c256_i32 = arith.constant 256 : i32
    %6 = arith.muli %arg1, %c256_i32 : i32
    %7 = tpu.assume_multiple %6, 256 : i32
    %c0_4 = arith.constant 0 : index
    %8 = arith.index_cast %7 : i32 to index
    %9 = vector.load %arg5[%c0_4, %8] : memref<1x256xf32, #tpu.memory_space<vmem>>, vector<1x256xf32>
    %10 = vector.broadcast %5 : vector<200x1xf32> to vector<200x256xf32>
    %11 = vector.broadcast %9 : vector<1x256xf32> to vector<200x256xf32>
    %12 = arith.addf %10, %11 : vector<200x256xf32>
    %cst_5 = arith.constant 2.000000e+00 : f32
    %13 = vector.broadcast %cst_5 : f32 to vector<200x256xf32>
    %14 = arith.mulf %13, %2 : vector<200x256xf32>
    %15 = arith.subf %12, %14 : vector<200x256xf32>
    %cst_6 = arith.constant 0.000000e+00 : f32
    %16 = vector.broadcast %cst_6 : f32 to vector<200x256xf32>
    %17 = arith.subf %16, %15 : vector<200x256xf32>
    %c4 = arith.constant 4 : index
    %18 = memref.load %arg2[%c4] : memref<5xf32, #tpu.memory_space<smem>>
    %19 = vector.broadcast %18 : f32 to vector<200x256xf32>
    %20 = arith.mulf %17, %19 : vector<200x256xf32>
    %21 = math.exp %20 : vector<200x256xf32>
    %22 = arith.mulf %21, %21 : vector<200x256xf32>
    %23 = arith.addf %21, %22 : vector<200x256xf32>
    %24 = arith.mulf %22, %22 : vector<200x256xf32>
    %25 = arith.addf %23, %24 : vector<200x256xf32>
    %26 = arith.mulf %24, %24 : vector<200x256xf32>
    %27 = arith.addf %25, %26 : vector<200x256xf32>
    %28 = arith.mulf %26, %26 : vector<200x256xf32>
    %29 = arith.addf %27, %28 : vector<200x256xf32>
    %c0_7 = arith.constant 0 : index
    %c0_8 = arith.constant 0 : index
    %30 = vector.load %arg6[%c0_7, %c0_8] : memref<200x256xf32, #tpu.memory_space<vmem>>, vector<200x256xf32>
    tpu.vector_store %arg6[%c0_7, %c0_8], %29 {strides = array<i32>} : memref<200x256xf32, #tpu.memory_space<vmem>>, vector<200x256xf32>,
    return
  }
  func.func @transform_0(%arg0: i32, %arg1: i32, %arg2: memref<5xf32, #tpu.memory_space<smem>>) -> (i32, i32) {
    %c0_i32 = arith.constant 0 : i32
    %c0_i32_0 = arith.constant 0 : i32
    return %arg0, %c0_i32 : i32, i32
  }
  func.func @transform_1(%arg0: i32, %arg1: i32, %arg2: memref<5xf32, #tpu.memory_space<smem>>) -> (i32, i32) {
    %c0_i32 = arith.constant 0 : i32
    %c0_i32_0 = arith.constant 0 : i32
    return %arg1, %c0_i32 : i32, i32
  }
  func.func @transform_2(%arg0: i32, %arg1: i32, %arg2: memref<5xf32, #tpu.memory_space<smem>>) -> (i32, i32) {
    %c0_i32 = arith.constant 0 : i32
    %c0_i32_0 = arith.constant 0 : i32
    %c0_i32_1 = arith.constant 0 : i32
    return %c0_i32, %c0_i32_0 : i32, i32
  }
  func.func @transform_3(%arg0: i32, %arg1: i32, %arg2: memref<5xf32, #tpu.memory_space<smem>>) -> (i32, i32) {
    %c0_i32 = arith.constant 0 : i32
    return %arg0, %arg1 : i32, i32
  }
}

</mosaic_0001>

<llo_original>
// kernel: tpu_custom_call.1
$region0: #{tpu_custom_call.1}
  #allocation0 [shape = 'u32[]', space=smem, size = 0x4, offset = 0x4, fixed_abs, tag = 'smem constant byte address 0x4 - core index']
  #allocation1 [shape = 'u32[72,128]{1,0:T(1,128)}', space=vmem, size = 0x9000, scoped, tag = 'internal scratch']
  #allocation2 [shape = 's32[1]{0}', space=sflag, size = 0x4, scoped, tag = 'scoped memory for tpu_custom_call.1']
  #allocation3 [shape = 'u8[512]{0}', space=smem, size = 0x200, scoped, tag = 'prefetched SMEM operand 0']
  %s0 = inlined_call_operand.vmem [shape: f32[5], index: 0, kind: input, shape index: {}]
  %s1 = inlined_call_operand.vmem [shape: f32[256,32], index: 1, kind: input, shape index: {}]
  %s2 = inlined_call_operand.vmem [shape: f32[256,32], index: 2, kind: input, shape index: {}]
  %s3 = inlined_call_operand.vmem [shape: f32[1,256], index: 3, kind: input, shape index: {}]
  %s4 = inlined_call_operand.hbm [shape: f32[200,256], index: 4, kind: output, shape index: {}]
  %s5 = sld [smem:[#allocation0]]
  $region22: #{tpu_custom_call.1} parent=0
    _
  %s7 = ssub.s32 1, %s5
  %s8 = scalar_select 0, %s7, %s5
  %s10 = sshll.u32 %s0, 4
  %s11 = int_to_ptr.vmem [resolvable:$true] %s10
  %13 = dma.vmem_to_smem %s11, 16, [#allocation3], [#allocation2]
  %15 = dma.done [#allocation2], 16
  %16 = sfence
  $region1: #{tpu_custom_call.1} parent=0
    #allocation4 [shape = 'u8[204800]{0}', space=vmem, size = 0x32000, scoped, tag = 'output window, operand 0, single buffered']
    #allocation5 [shape = 's32[1]{0}', space=sflag, size = 0x4, scoped, tag = 'scoped memory for tpu_custom_call.1']
    %17 = vsyncpa [#allocation5], 0
    // Predicated region
    $region2: #{tpu_custom_call.1} parent=1 // pred_check
      _
    $region3: #{tpu_custom_call.1} parent=1 // pred_check_branch
      %19 = sbr.rel (0) target = $region5
    $region4: #{tpu_custom_call.1} parent=1 // pred_region
      _
    $region5: #{tpu_custom_call.1} parent=1 // pred_fallthru
      _
    // Predicated region
    $region6: #{tpu_custom_call.1} parent=1 // pred_check
      _
    $region7: #{tpu_custom_call.1} parent=1 // pred_check_branch
      %21 = sbr.rel (0) target = $region9
    $region8: #{tpu_custom_call.1} parent=1 // pred_region
      _
    $region9: #{tpu_custom_call.1} parent=1 // pred_fallthru
      _
    // Predicated region
    $region10: #{tpu_custom_call.1} parent=1 // pred_check
      _
    $region11: #{tpu_custom_call.1} parent=1 // pred_check_branch
      %23 = sbr.rel (0) target = $region13
    $region12: #{tpu_custom_call.1} parent=1 // pred_region
      _
    $region13: #{tpu_custom_call.1} parent=1 // pred_fallthru
      _
    %v24 = vld [vmem:[%s1] sm:$0xff]
    %v25 = vld [vmem:[%s1 + $0x8] sm:$0xff]
    %v26 = vld [vmem:[%s1 + $0x10] sm:$0xff]
    %v27 = vld [vmem:[%s1 + $0x18] sm:$0xff]
    %v28 = vld [vmem:[%s1 + $0x20] sm:$0xff]
    %v29 = vld [vmem:[%s1 + $0x28] sm:$0xff]
    %v30 = vld [vmem:[%s1 + $0x30] sm:$0xff]
    %v31 = vld [vmem:[%s1 + $0x38] sm:$0xff]
    %v32 = vld [vmem:[%s1 + $0x40] sm:$0xff]
    %v33 = vld [vmem:[%s1 + $0x48] sm:$0xff]
    %v34 = vld [vmem:[%s1 + $0x50] sm:$0xff]
    %v35 = vld [vmem:[%s1 + $0x58] sm:$0xff]
    %v36 = vld [vmem:[%s1 + $0x60] sm:$0xff]
    %v37 = vld [vmem:[%s1 + $0x68] sm:$0xff]
    %v38 = vld [vmem:[%s1 + $0x70] sm:$0xff]
    %v39 = vld [vmem:[%s1 + $0x78] sm:$0xff]
    %v40 = vld [vmem:[%s1 + $0x80] sm:$0xff]
    %v41 = vld [vmem:[%s1 + $0x88] sm:$0xff]
    %v42 = vld [vmem:[%s1 + $0x90] sm:$0xff]
    %v43 = vld [vmem:[%s1 + $0x98] sm:$0xff]
    %v44 = vld [vmem:[%s1 + $0xa0] sm:$0xff]
    %v45 = vld [vmem:[%s1 + $0xa8] sm:$0xff]
    %v46 = vld [vmem:[%s1 + $0xb0] sm:$0xff]
    %v47 = vld [vmem:[%s1 + $0xb8] sm:$0xff]
    %v48 = vld [vmem:[%s1 + $0xc0] sm:$0xff]
    %v49 = vld [vmem:[%s2] sm:$0xff]
    %v50 = vld [vmem:[%s2 + $0x8] sm:$0xff]
    %v51 = vld [vmem:[%s2 + $0x10] sm:$0xff]
    %v52 = vld [vmem:[%s2 + $0x18] sm:$0xff]
    %v53 = vld [vmem:[%s2 + $0x20] sm:$0xff]
    %v54 = vld [vmem:[%s2 + $0x28] sm:$0xff]
    %v55 = vld [vmem:[%s2 + $0x30] sm:$0xff]
    %v56 = vld [vmem:[%s2 + $0x38] sm:$0xff]
    %v57 = vld [vmem:[%s2 + $0x40] sm:$0xff]
    %v58 = vld [vmem:[%s2 + $0x48] sm:$0xff]
    %v59 = vld [vmem:[%s2 + $0x50] sm:$0xff]
    %v60 = vld [vmem:[%s2 + $0x58] sm:$0xff]
    %v61 = vld [vmem:[%s2 + $0x60] sm:$0xff]
    %v62 = vld [vmem:[%s2 + $0x68] sm:$0xff]
    %v63 = vld [vmem:[%s2 + $0x70] sm:$0xff]
    %v64 = vld [vmem:[%s2 + $0x78] sm:$0xff]
    %v65 = vld [vmem:[%s2 + $0x80] sm:$0xff]
    %v66 = vld [vmem:[%s2 + $0x88] sm:$0xff]
    %v67 = vld [vmem:[%s2 + $0x90] sm:$0xff]
    %v68 = vld [vmem:[%s2 + $0x98] sm:$0xff]
    %v69 = vld [vmem:[%s2 + $0xa0] sm:$0xff]
    %v70 = vld [vmem:[%s2 + $0xa8] sm:$0xff]
    %v71 = vld [vmem:[%s2 + $0xb0] sm:$0xff]
    %v72 = vld [vmem:[%s2 + $0xb8] sm:$0xff]
    %v73 = vld [vmem:[%s2 + $0xc0] sm:$0xff]
    %v74 = vld [vmem:[%s2 + $0xc8] sm:$0xff]
    %v75 = vld [vmem:[%s2 + $0xd0] sm:$0xff]
    %v76 = vld [vmem:[%s2 + $0xd8] sm:$0xff]
    %v77 = vld [vmem:[%s2 + $0xe0] sm:$0xff]
    %v78 = vld [vmem:[%s2 + $0xe8] sm:$0xff]
    %v79 = vld [vmem:[%s2 + $0xf0] sm:$0xff]
    %v80 = vld [vmem:[%s2 + $0xf8] sm:$0xff]
    %vm81 = vcmask 261120
    %v83 = vsel %vm81, %v24, 0
    %v86 = vsel %vm81, %v25, 0
    %v89 = vsel %vm81, %v26, 0
    %v92 = vsel %vm81, %v27, 0
    %v95 = vsel %vm81, %v28, 0
    %v98 = vsel %vm81, %v29, 0
    %v101 = vsel %vm81, %v30, 0
    %v104 = vsel %vm81, %v31, 0
    %v107 = vsel %vm81, %v32, 0
    %v110 = vsel %vm81, %v33, 0
    %v113 = vsel %vm81, %v34, 0
    %v116 = vsel %vm81, %v35, 0
    %v119 = vsel %vm81, %v36, 0
    %v122 = vsel %vm81, %v37, 0
    %v125 = vsel %vm81, %v38, 0
    %v128 = vsel %vm81, %v39, 0
    %v131 = vsel %vm81, %v40, 0
    %v134 = vsel %vm81, %v41, 0
    %v137 = vsel %vm81, %v42, 0
    %v140 = vsel %vm81, %v43, 0
    %v143 = vsel %vm81, %v44, 0
    %v146 = vsel %vm81, %v45, 0
    %v149 = vsel %vm81, %v46, 0
    %v152 = vsel %vm81, %v47, 0
    %v155 = vsel %vm81, %v48, 0
    %v158 = vsel %vm81, %v49, 0
    %v161 = vsel %vm81, %v50, 0
    %v164 = vsel %vm81, %v51, 0
    %v167 = vsel %vm81, %v52, 0
    %v170 = vsel %vm81, %v53, 0
    %v173 = vsel %vm81, %v54, 0
    %v176 = vsel %vm81, %v55, 0
    %v179 = vsel %vm81, %v56, 0
    %v182 = vsel %vm81, %v57, 0
    %v185 = vsel %vm81, %v58, 0
    %v188 = vsel %vm81, %v59, 0
    %v191 = vsel %vm81, %v60, 0
    %v194 = vsel %vm81, %v61, 0
    %v197 = vsel %vm81, %v62, 0
    %v200 = vsel %vm81, %v63, 0
    %v203 = vsel %vm81, %v64, 0
    %v206 = vsel %vm81, %v65, 0
    %v209 = vsel %vm81, %v66, 0
    %v212 = vsel %vm81, %v67, 0
    %v215 = vsel %vm81, %v68, 0
    %v218 = vsel %vm81, %v69, 0
    %v221 = vsel %vm81, %v70, 0
    %v224 = vsel %vm81, %v71, 0
    %v227 = vsel %vm81, %v72, 0
    %v230 = vsel %vm81, %v73, 0
    %v233 = vsel %vm81, %v74, 0
    %v236 = vsel %vm81, %v75, 0
    %v239 = vsel %vm81, %v76, 0
    %v242 = vsel %vm81, %v77, 0
    %v245 = vsel %vm81, %v78, 0
    %v248 = vsel %vm81, %v79, 0
    %v251 = vsel %vm81, %v80, 0
    %253 = vmatpush.xpose.msra.mxu0 %v203
    %254 = vmatpush.xpose.msra.mxu0 %v200
    %255 = vmatpush.xpose.msra.mxu0 %v197
    %256 = vmatpush.xpose.msra.mxu0 %v194
    %257 = vmatpush.xpose.msra.mxu0 %v191
    %258 = vmatpush.xpose.msra.mxu0 %v188
    %259 = vmatpush.xpose.msra.mxu0 %v185
    %260 = vmatpush.xpose.msra.mxu0 %v182
    %261 = vmatpush.xpose.msra.mxu0 %v179
    %262 = vmatpush.xpose.msra.mxu0 %v176
    %263 = vmatpush.xpose.msra.mxu0 %v173
    %264 = vmatpush.xpose.msra.mxu0 %v170
    %265 = vmatpush.xpose.msra.mxu0 %v167
    %266 = vmatpush.xpose.msra.mxu0 %v164
    %267 = vmatpush.xpose.msra.mxu0 %v161
    %268 = vmatpush.xpose.msra.mxu0 %v158
    %269 = vmatmul.f32.gmra.mxu0 %v83
    %v270 = vpop.f32.mrf.mxu0
    %v271 = vadd.f32 0.0, %v270
    %272 = vmatmul.f32.gmra.mxu0 %v86
    %v273 = vpop.f32.mrf.mxu0
    %v274 = vadd.f32 0.0, %v273
    %275 = vmatmul.f32.gmra.mxu0 %v89
    %v276 = vpop.f32.mrf.mxu0
    %v277 = vadd.f32 0.0, %v276
    %278 = vmatmul.f32.gmra.mxu0 %v92
    %v279 = vpop.f32.mrf.mxu0
    %v280 = vadd.f32 0.0, %v279
    %281 = vmatmul.f32.gmra.mxu0 %v95
    %v282 = vpop.f32.mrf.mxu0
    %v283 = vadd.f32 0.0, %v282
    %284 = vmatmul.f32.gmra.mxu0 %v98
    %v285 = vpop.f32.mrf.mxu0
    %v286 = vadd.f32 0.0, %v285
    %287 = vmatmul.f32.gmra.mxu0 %v101
    %v288 = vpop.f32.mrf.mxu0
    %v289 = vadd.f32 0.0, %v288
    %290 = vmatmul.f32.gmra.mxu0 %v104
    %v291 = vpop.f32.mrf.mxu0
    %v292 = vadd.f32 0.0, %v291
    %293 = vmatmul.f32.gmra.mxu0 %v107
    %v294 = vpop.f32.mrf.mxu0
    %v295 = vadd.f32 0.0, %v294
    %296 = vmatmul.f32.gmra.mxu0 %v110
    %v297 = vpop.f32.mrf.mxu0
    %v298 = vadd.f32 0.0, %v297
    %299 = vmatmul.f32.gmra.mxu0 %v113
    %v300 = vpop.f32.mrf.mxu0
    %v301 = vadd.f32 0.0, %v300
    %302 = vmatmul.f32.gmra.mxu0 %v116
    %v303 = vpop.f32.mrf.mxu0
    %v304 = vadd.f32 0.0, %v303
    %305 = vmatmul.f32.gmra.mxu0 %v119
    %v306 = vpop.f32.mrf.mxu0
    %v307 = vadd.f32 0.0, %v306
    %308 = vmatmul.f32.gmra.mxu0 %v122
    %v309 = vpop.f32.mrf.mxu0
    %v310 = vadd.f32 0.0, %v309
    %311 = vmatmul.f32.gmra.mxu0 %v125
    %v312 = vpop.f32.mrf.mxu0
    %v313 = vadd.f32 0.0, %v312
    %314 = vmatmul.f32.gmra.mxu0 %v128
    %v315 = vpop.f32.mrf.mxu0
    %v316 = vadd.f32 0.0, %v315
    %317 = vmatmul.f32.gmra.mxu0 %v131
    %v318 = vpop.f32.mrf.mxu0
    %v319 = vadd.f32 0.0, %v318
    %320 = vmatmul.f32.gmra.mxu0 %v134
    %v321 = vpop.f32.mrf.mxu0
    %v322 = vadd.f32 0.0, %v321
    %323 = vmatmul.f32.gmra.mxu0 %v137
    %v324 = vpop.f32.mrf.mxu0
    %v325 = vadd.f32 0.0, %v324
    %326 = vmatmul.f32.gmra.mxu0 %v140
    %v327 = vpop.f32.mrf.mxu0
    %v328 = vadd.f32 0.0, %v327
    %329 = vmatmul.f32.gmra.mxu0 %v143
    %v330 = vpop.f32.mrf.mxu0
    %v331 = vadd.f32 0.0, %v330
    %332 = vmatmul.f32.gmra.mxu0 %v146
    %v333 = vpop.f32.mrf.mxu0
    %v334 = vadd.f32 0.0, %v333
    %335 = vmatmul.f32.gmra.mxu0 %v149
    %v336 = vpop.f32.mrf.mxu0
    %v337 = vadd.f32 0.0, %v336
    %338 = vmatmul.f32.gmra.mxu0 %v152
    %v339 = vpop.f32.mrf.mxu0
    %v340 = vadd.f32 0.0, %v339
    %341 = vmatmul.f32.gmra.mxu0 %v155
    %v342 = vpop.f32.mrf.mxu0
    %v343 = vadd.f32 0.0, %v342
    %344 = vdwg.mxu0
    %345 = vmatpush.xpose.msra.mxu0 %v251
    %346 = vmatpush.xpose.msra.mxu0 %v248
    %347 = vmatpush.xpose.msra.mxu0 %v245
    %348 = vmatpush.xpose.msra.mxu0 %v242
    %349 = vmatpush.xpose.msra.mxu0 %v239
    %350 = vmatpush.xpose.msra.mxu0 %v236
    %351 = vmatpush.xpose.msra.mxu0 %v233
    %352 = vmatpush.xpose.msra.mxu0 %v230
    %353 = vmatpush.xpose.msra.mxu0 %v227
    %354 = vmatpush.xpose.msra.mxu0 %v224
    %355 = vmatpush.xpose.msra.mxu0 %v221
    %356 = vmatpush.xpose.msra.mxu0 %v218
    %357 = vmatpush.xpose.msra.mxu0 %v215
    %358 = vmatpush.xpose.msra.mxu0 %v212
    %359 = vmatpush.xpose.msra.mxu0 %v209
    %360 = vmatpush.xpose.msra.mxu0 %v206
    %361 = vmatmul.f32.gmra.mxu0 %v83
    %v362 = vpop.f32.mrf.mxu0
    %v363 = vadd.f32 0.0, %v362
    %364 = vmatmul.f32.gmra.mxu0 %v86
    %v365 = vpop.f32.mrf.mxu0
    %v366 = vadd.f32 0.0, %v365
    %367 = vmatmul.f32.gmra.mxu0 %v89
    %v368 = vpop.f32.mrf.mxu0
    %v369 = vadd.f32 0.0, %v368
    %370 = vmatmul.f32.gmra.mxu0 %v92
    %v371 = vpop.f32.mrf.mxu0
    %v372 = vadd.f32 0.0, %v371
    %373 = vmatmul.f32.gmra.mxu0 %v95
    %v374 = vpop.f32.mrf.mxu0
    %v375 = vadd.f32 0.0, %v374
    %376 = vmatmul.f32.gmra.mxu0 %v98
    %v377 = vpop.f32.mrf.mxu0
    %v378 = vadd.f32 0.0, %v377
    %379 = vmatmul.f32.gmra.mxu0 %v101
    %v380 = vpop.f32.mrf.mxu0
    %v381 = vadd.f32 0.0, %v380
    %382 = vmatmul.f32.gmra.mxu0 %v104
    %v383 = vpop.f32.mrf.mxu0
    %v384 = vadd.f32 0.0, %v383
    %385 = vmatmul.f32.gmra.mxu0 %v107
    %v386 = vpop.f32.mrf.mxu0
    %v387 = vadd.f32 0.0, %v386
    %388 = vmatmul.f32.gmra.mxu0 %v110
    %v389 = vpop.f32.mrf.mxu0
    %v390 = vadd.f32 0.0, %v389
    %391 = vmatmul.f32.gmra.mxu0 %v113
    %v392 = vpop.f32.mrf.mxu0
    %v393 = vadd.f32 0.0, %v392
    %394 = vmatmul.f32.gmra.mxu0 %v116
    %v395 = vpop.f32.mrf.mxu0
    %v396 = vadd.f32 0.0, %v395
    %397 = vmatmul.f32.gmra.mxu0 %v119
    %v398 = vpop.f32.mrf.mxu0
    %v399 = vadd.f32 0.0, %v398
    %400 = vmatmul.f32.gmra.mxu0 %v122
    %v401 = vpop.f32.mrf.mxu0
    %v402 = vadd.f32 0.0, %v401
    %403 = vmatmul.f32.gmra.mxu0 %v125
    %v404 = vpop.f32.mrf.mxu0
    %v405 = vadd.f32 0.0, %v404
    %406 = vmatmul.f32.gmra.mxu0 %v128
    %v407 = vpop.f32.mrf.mxu0
    %v408 = vadd.f32 0.0, %v407
    %409 = vmatmul.f32.gmra.mxu0 %v131
    %v410 = vpop.f32.mrf.mxu0
    %v411 = vadd.f32 0.0, %v410
    %412 = vmatmul.f32.gmra.mxu0 %v134
    %v413 = vpop.f32.mrf.mxu0
    %v414 = vadd.f32 0.0, %v413
    %415 = vmatmul.f32.gmra.mxu0 %v137
    %v416 = vpop.f32.mrf.mxu0
    %v417 = vadd.f32 0.0, %v416
    %418 = vmatmul.f32.gmra.mxu0 %v140
    %v419 = vpop.f32.mrf.mxu0
    %v420 = vadd.f32 0.0, %v419
    %421 = vmatmul.f32.gmra.mxu0 %v143
    %v422 = vpop.f32.mrf.mxu0
    %v423 = vadd.f32 0.0, %v422
    %424 = vmatmul.f32.gmra.mxu0 %v146
    %v425 = vpop.f32.mrf.mxu0
    %v426 = vadd.f32 0.0, %v425
    %427 = vmatmul.f32.gmra.mxu0 %v149
    %v428 = vpop.f32.mrf.mxu0
    %v429 = vadd.f32 0.0, %v428
    %430 = vmatmul.f32.gmra.mxu0 %v152
    %v431 = vpop.f32.mrf.mxu0
    %v432 = vadd.f32 0.0, %v431
    %433 = vmatmul.f32.gmra.mxu0 %v155
    %v434 = vpop.f32.mrf.mxu0
    %v435 = vadd.f32 0.0, %v434
    %436 = vdwg.mxu0
    %v437 = vmul.f32 %v24, %v24
    %v438 = vmul.f32 %v25, %v25
    %v439 = vmul.f32 %v26, %v26
    %v440 = vmul.f32 %v27, %v27
    %v441 = vmul.f32 %v28, %v28
    %v442 = vmul.f32 %v29, %v29
    %v443 = vmul.f32 %v30, %v30
    %v444 = vmul.f32 %v31, %v31
    %v445 = vmul.f32 %v32, %v32
    %v446 = vmul.f32 %v33, %v33
    %v447 = vmul.f32 %v34, %v34
    %v448 = vmul.f32 %v35, %v35
    %v449 = vmul.f32 %v36, %v36
    %v450 = vmul.f32 %v37, %v37
    %v451 = vmul.f32 %v38, %v38
    %v452 = vmul.f32 %v39, %v39
    %v453 = vmul.f32 %v40, %v40
    %v454 = vmul.f32 %v41, %v41
    %v455 = vmul.f32 %v42, %v42
    %v456 = vmul.f32 %v43, %v43
    %v457 = vmul.f32 %v44, %v44
    %v458 = vmul.f32 %v45, %v45
    %v459 = vmul.f32 %v46, %v46
    %v460 = vmul.f32 %v47, %v47
    %v461 = vmul.f32 %v48, %v48
    %v462 = vsel %vm81, %v437, 0.0
    %463 = vadd.xlane.f32.xlu0 %v462
    %v464 = vpop.xlane.xlu0 %463
    %v465 = vsel %vm81, %v438, 0.0
    %466 = vadd.xlane.f32.xlu0 %v465
    %v467 = vpop.xlane.xlu0 %466
    %v468 = vsel %vm81, %v439, 0.0
    %469 = vadd.xlane.f32.xlu0 %v468
    %v470 = vpop.xlane.xlu0 %469
    %v471 = vsel %vm81, %v440, 0.0
    %472 = vadd.xlane.f32.xlu0 %v471
    %v473 = vpop.xlane.xlu0 %472
    %v474 = vsel %vm81, %v441, 0.0
    %475 = vadd.xlane.f32.xlu0 %v474
    %v476 = vpop.xlane.xlu0 %475
    %v477 = vsel %vm81, %v442, 0.0
    %478 = vadd.xlane.f32.xlu0 %v477
    %v479 = vpop.xlane.xlu0 %478
    %v480 = vsel %vm81, %v443, 0.0
    %481 = vadd.xlane.f32.xlu0 %v480
    %v482 = vpop.xlane.xlu0 %481
    %v483 = vsel %vm81, %v444, 0.0
    %484 = vadd.xlane.f32.xlu0 %v483
    %v485 = vpop.xlane.xlu0 %484
    %v486 = vsel %vm81, %v445, 0.0
    %487 = vadd.xlane.f32.xlu0 %v486
    %v488 = vpop.xlane.xlu0 %487
    %v489 = vsel %vm81, %v446, 0.0
    %490 = vadd.xlane.f32.xlu0 %v489
    %v491 = vpop.xlane.xlu0 %490
    %v492 = vsel %vm81, %v447, 0.0
    %493 = vadd.xlane.f32.xlu0 %v492
    %v494 = vpop.xlane.xlu0 %493
    %v495 = vsel %vm81, %v448, 0.0
    %496 = vadd.xlane.f32.xlu0 %v495
    %v497 = vpop.xlane.xlu0 %496
    %v498 = vsel %vm81, %v449, 0.0
    %499 = vadd.xlane.f32.xlu0 %v498
    %v500 = vpop.xlane.xlu0 %499
    %v501 = vsel %vm81, %v450, 0.0
    %502 = vadd.xlane.f32.xlu0 %v501
    %v503 = vpop.xlane.xlu0 %502
    %v504 = vsel %vm81, %v451, 0.0
    %505 = vadd.xlane.f32.xlu0 %v504
    %v506 = vpop.xlane.xlu0 %505
    %v507 = vsel %vm81, %v452, 0.0
    %508 = vadd.xlane.f32.xlu0 %v507
    %v509 = vpop.xlane.xlu0 %508
    %v510 = vsel %vm81, %v453, 0.0
    %511 = vadd.xlane.f32.xlu0 %v510
    %v512 = vpop.xlane.xlu0 %511
    %v513 = vsel %vm81, %v454, 0.0
    %514 = vadd.xlane.f32.xlu0 %v513
    %v515 = vpop.xlane.xlu0 %514
    %v516 = vsel %vm81, %v455, 0.0
    %517 = vadd.xlane.f32.xlu0 %v516
    %v518 = vpop.xlane.xlu0 %517
    %v519 = vsel %vm81, %v456, 0.0
    %520 = vadd.xlane.f32.xlu0 %v519
    %v521 = vpop.xlane.xlu0 %520
    %v522 = vsel %vm81, %v457, 0.0
    %523 = vadd.xlane.f32.xlu0 %v522
    %v524 = vpop.xlane.xlu0 %523
    %v525 = vsel %vm81, %v458, 0.0
    %526 = vadd.xlane.f32.xlu0 %v525
    %v527 = vpop.xlane.xlu0 %526
    %v528 = vsel %vm81, %v459, 0.0
    %529 = vadd.xlane.f32.xlu0 %v528
    %v530 = vpop.xlane.xlu0 %529
    %v531 = vsel %vm81, %v460, 0.0
    %532 = vadd.xlane.f32.xlu0 %v531
    %v533 = vpop.xlane.xlu0 %532
    %v534 = vsel %vm81, %v461, 0.0
    %535 = vadd.xlane.f32.xlu0 %v534
    %v536 = vpop.xlane.xlu0 %535
    %s537 = smul.u32 0, 256
    %s538 = sshra.s32 %s537, 7
    %s539 = sand.u32 %s537, 127
    %s540 = scalar_lea.vmem %s3, %s538
    %v541 = vld [vmem:[%s540] sm:$0x3]
    %v543 = vperm.slane %v541, 0
    %v544 = vperm.slane %v541, 1
    %v547 = vadd.f32 %v464, %v543
    %v548 = vadd.f32 %v464, %v544
    %v549 = vadd.f32 %v467, %v543
    %v550 = vadd.f32 %v467, %v544
    %v551 = vadd.f32 %v470, %v543
    %v552 = vadd.f32 %v470, %v544
    %v553 = vadd.f32 %v473, %v543
    %v554 = vadd.f32 %v473, %v544
    %v555 = vadd.f32 %v476, %v543
    %v556 = vadd.f32 %v476, %v544
    %v557 = vadd.f32 %v479, %v543
    %v558 = vadd.f32 %v479, %v544
    %v559 = vadd.f32 %v482, %v543
    %v560 = vadd.f32 %v482, %v544
    %v561 = vadd.f32 %v485, %v543
    %v562 = vadd.f32 %v485, %v544
    %v563 = vadd.f32 %v488, %v543
    %v564 = vadd.f32 %v488, %v544
    %v565 = vadd.f32 %v491, %v543
    %v566 = vadd.f32 %v491, %v544
    %v567 = vadd.f32 %v494, %v543
    %v568 = vadd.f32 %v494, %v544
    %v569 = vadd.f32 %v497, %v543
    %v570 = vadd.f32 %v497, %v544
    %v571 = vadd.f32 %v500, %v543
    %v572 = vadd.f32 %v500, %v544
    %v573 = vadd.f32 %v503, %v543
    %v574 = vadd.f32 %v503, %v544
    %v575 = vadd.f32 %v506, %v543
    %v576 = vadd.f32 %v506, %v544
    %v577 = vadd.f32 %v509, %v543
    %v578 = vadd.f32 %v509, %v544
    %v579 = vadd.f32 %v512, %v543
    %v580 = vadd.f32 %v512, %v544
    %v581 = vadd.f32 %v515, %v543
    %v582 = vadd.f32 %v515, %v544
    %v583 = vadd.f32 %v518, %v543
    %v584 = vadd.f32 %v518, %v544
    %v585 = vadd.f32 %v521, %v543
    %v586 = vadd.f32 %v521, %v544
    %v587 = vadd.f32 %v524, %v543
    %v588 = vadd.f32 %v524, %v544
    %v589 = vadd.f32 %v527, %v543
    %v590 = vadd.f32 %v527, %v544
    %v591 = vadd.f32 %v530, %v543
    %v592 = vadd.f32 %v530, %v544
    %v593 = vadd.f32 %v533, %v543
    %v594 = vadd.f32 %v533, %v544
    %v595 = vadd.f32 %v536, %v543
    %v596 = vadd.f32 %v536, %v544
    %v597 = vmul.f32 %v271, 2.0
    %v598 = vmul.f32 %v363, 2.0
    %v599 = vmul.f32 %v274, 2.0
    %v600 = vmul.f32 %v366, 2.0
    %v601 = vmul.f32 %v277, 2.0
    %v602 = vmul.f32 %v369, 2.0
    %v603 = vmul.f32 %v280, 2.0
    %v604 = vmul.f32 %v372, 2.0
    %v605 = vmul.f32 %v283, 2.0
    %v606 = vmul.f32 %v375, 2.0
    %v607 = vmul.f32 %v286, 2.0
    %v608 = vmul.f32 %v378, 2.0
    %v609 = vmul.f32 %v289, 2.0
    %v610 = vmul.f32 %v381, 2.0
    %v611 = vmul.f32 %v292, 2.0
    %v612 = vmul.f32 %v384, 2.0
    %v613 = vmul.f32 %v295, 2.0
    %v614 = vmul.f32 %v387, 2.0
    %v615 = vmul.f32 %v298, 2.0
    %v616 = vmul.f32 %v390, 2.0
    %v617 = vmul.f32 %v301, 2.0
    %v618 = vmul.f32 %v393, 2.0
    %v619 = vmul.f32 %v304, 2.0
    %v620 = vmul.f32 %v396, 2.0
    %v621 = vmul.f32 %v307, 2.0
    %v622 = vmul.f32 %v399, 2.0
    %v623 = vmul.f32 %v310, 2.0
    %v624 = vmul.f32 %v402, 2.0
    %v625 = vmul.f32 %v313, 2.0
    %v626 = vmul.f32 %v405, 2.0
    %v627 = vmul.f32 %v316, 2.0
    %v628 = vmul.f32 %v408, 2.0
    %v629 = vmul.f32 %v319, 2.0
    %v630 = vmul.f32 %v411, 2.0
    %v631 = vmul.f32 %v322, 2.0
    %v632 = vmul.f32 %v414, 2.0
    %v633 = vmul.f32 %v325, 2.0
    %v634 = vmul.f32 %v417, 2.0
    %v635 = vmul.f32 %v328, 2.0
    %v636 = vmul.f32 %v420, 2.0
    %v637 = vmul.f32 %v331, 2.0
    %v638 = vmul.f32 %v423, 2.0
    %v639 = vmul.f32 %v334, 2.0
    %v640 = vmul.f32 %v426, 2.0
    %v641 = vmul.f32 %v337, 2.0
    %v642 = vmul.f32 %v429, 2.0
    %v643 = vmul.f32 %v340, 2.0
    %v644 = vmul.f32 %v432, 2.0
    %v645 = vmul.f32 %v343, 2.0
    %v646 = vmul.f32 %v435, 2.0
    %v647 = vsub.f32 %v547, %v597
    %v648 = vsub.f32 %v548, %v598
    %v649 = vsub.f32 %v549, %v599
    %v650 = vsub.f32 %v550, %v600
    %v651 = vsub.f32 %v551, %v601
    %v652 = vsub.f32 %v552, %v602
    %v653 = vsub.f32 %v553, %v603
    %v654 = vsub.f32 %v554, %v604
    %v655 = vsub.f32 %v555, %v605
    %v656 = vsub.f32 %v556, %v606
    %v657 = vsub.f32 %v557, %v607
    %v658 = vsub.f32 %v558, %v608
    %v659 = vsub.f32 %v559, %v609
    %v660 = vsub.f32 %v560, %v610
    %v661 = vsub.f32 %v561, %v611
    %v662 = vsub.f32 %v562, %v612
    %v663 = vsub.f32 %v563, %v613
    %v664 = vsub.f32 %v564, %v614
    %v665 = vsub.f32 %v565, %v615
    %v666 = vsub.f32 %v566, %v616
    %v667 = vsub.f32 %v567, %v617
    %v668 = vsub.f32 %v568, %v618
    %v669 = vsub.f32 %v569, %v619
    %v670 = vsub.f32 %v570, %v620
    %v671 = vsub.f32 %v571, %v621
    %v672 = vsub.f32 %v572, %v622
    %v673 = vsub.f32 %v573, %v623
    %v674 = vsub.f32 %v574, %v624
    %v675 = vsub.f32 %v575, %v625
    %v676 = vsub.f32 %v576, %v626
    %v677 = vsub.f32 %v577, %v627
    %v678 = vsub.f32 %v578, %v628
    %v679 = vsub.f32 %v579, %v629
    %v680 = vsub.f32 %v580, %v630
    %v681 = vsub.f32 %v581, %v631
    %v682 = vsub.f32 %v582, %v632
    %v683 = vsub.f32 %v583, %v633
    %v684 = vsub.f32 %v584, %v634
    %v685 = vsub.f32 %v585, %v635
    %v686 = vsub.f32 %v586, %v636
    %v687 = vsub.f32 %v587, %v637
    %v688 = vsub.f32 %v588, %v638
    %v689 = vsub.f32 %v589, %v639
    %v690 = vsub.f32 %v590, %v640
    %v691 = vsub.f32 %v591, %v641
    %v692 = vsub.f32 %v592, %v642
    %v693 = vsub.f32 %v593, %v643
    %v694 = vsub.f32 %v594, %v644
    %v695 = vsub.f32 %v595, %v645
    %v696 = vsub.f32 %v596, %v646
    %v697 = vsub.f32 0.0, %v647
    %v698 = vsub.f32 0.0, %v648
    %v699 = vsub.f32 0.0, %v649
    %v700 = vsub.f32 0.0, %v650
    %v701 = vsub.f32 0.0, %v651
    %v702 = vsub.f32 0.0, %v652
    %v703 = vsub.f32 0.0, %v653
    %v704 = vsub.f32 0.0, %v654
    %v705 = vsub.f32 0.0, %v655
    %v706 = vsub.f32 0.0, %v656
    %v707 = vsub.f32 0.0, %v657
    %v708 = vsub.f32 0.0, %v658
    %v709 = vsub.f32 0.0, %v659
    %v710 = vsub.f32 0.0, %v660
    %v711 = vsub.f32 0.0, %v661
    %v712 = vsub.f32 0.0, %v662
    %v713 = vsub.f32 0.0, %v663
    %v714 = vsub.f32 0.0, %v664
    %v715 = vsub.f32 0.0, %v665
    %v716 = vsub.f32 0.0, %v666
    %v717 = vsub.f32 0.0, %v667
    %v718 = vsub.f32 0.0, %v668
    %v719 = vsub.f32 0.0, %v669
    %v720 = vsub.f32 0.0, %v670
    %v721 = vsub.f32 0.0, %v671
    %v722 = vsub.f32 0.0, %v672
    %v723 = vsub.f32 0.0, %v673
    %v724 = vsub.f32 0.0, %v674
    %v725 = vsub.f32 0.0, %v675
    %v726 = vsub.f32 0.0, %v676
    %v727 = vsub.f32 0.0, %v677
    %v728 = vsub.f32 0.0, %v678
    %v729 = vsub.f32 0.0, %v679
    %v730 = vsub.f32 0.0, %v680
    %v731 = vsub.f32 0.0, %v681
    %v732 = vsub.f32 0.0, %v682
    %v733 = vsub.f32 0.0, %v683
    %v734 = vsub.f32 0.0, %v684
    %v735 = vsub.f32 0.0, %v685
    %v736 = vsub.f32 0.0, %v686
    %v737 = vsub.f32 0.0, %v687
    %v738 = vsub.f32 0.0, %v688
    %v739 = vsub.f32 0.0, %v689
    %v740 = vsub.f32 0.0, %v690
    %v741 = vsub.f32 0.0, %v691
    %v742 = vsub.f32 0.0, %v692
    %v743 = vsub.f32 0.0, %v693
    %v744 = vsub.f32 0.0, %v694
    %v745 = vsub.f32 0.0, %v695
    %v746 = vsub.f32 0.0, %v696
    %s747 = sld [smem:[#allocation3 + $0x4]]
    %v748 = vstv %s747
    %v749 = vmul.f32 %v697, %v748
    %v750 = vmul.f32 %v698, %v748
    %v751 = vmul.f32 %v699, %v748
    %v752 = vmul.f32 %v700, %v748
    %v753 = vmul.f32 %v701, %v748
    %v754 = vmul.f32 %v702, %v748
    %v755 = vmul.f32 %v703, %v748
    %v756 = vmul.f32 %v704, %v748
    %v757 = vmul.f32 %v705, %v748
    %v758 = vmul.f32 %v706, %v748
    %v759 = vmul.f32 %v707, %v748
    %v760 = vmul.f32 %v708, %v748
    %v761 = vmul.f32 %v709, %v748
    %v762 = vmul.f32 %v710, %v748
    %v763 = vmul.f32 %v711, %v748
    %v764 = vmul.f32 %v712, %v748
    %v765 = vmul.f32 %v713, %v748
    %v766 = vmul.f32 %v714, %v748
    %v767 = vmul.f32 %v715, %v748
    %v768 = vmul.f32 %v716, %v748
    %v769 = vmul.f32 %v717, %v748
    %v770 = vmul.f32 %v718, %v748
    %v771 = vmul.f32 %v719, %v748
    %v772 = vmul.f32 %v720, %v748
    %v773 = vmul.f32 %v721, %v748
    %v774 = vmul.f32 %v722, %v748
    %v775 = vmul.f32 %v723, %v748
    %v776 = vmul.f32 %v724, %v748
    %v777 = vmul.f32 %v725, %v748
    %v778 = vmul.f32 %v726, %v748
    %v779 = vmul.f32 %v727, %v748
    %v780 = vmul.f32 %v728, %v748
    %v781 = vmul.f32 %v729, %v748
    %v782 = vmul.f32 %v730, %v748
    %v783 = vmul.f32 %v731, %v748
    %v784 = vmul.f32 %v732, %v748
    %v785 = vmul.f32 %v733, %v748
    %v786 = vmul.f32 %v734, %v748
    %v787 = vmul.f32 %v735, %v748
    %v788 = vmul.f32 %v736, %v748
    %v789 = vmul.f32 %v737, %v748
    %v790 = vmul.f32 %v738, %v748
    %v791 = vmul.f32 %v739, %v748
    %v792 = vmul.f32 %v740, %v748
    %v793 = vmul.f32 %v741, %v748
    %v794 = vmul.f32 %v742, %v748
    %v795 = vmul.f32 %v743, %v748
    %v796 = vmul.f32 %v744, %v748
    %v797 = vmul.f32 %v745, %v748
    %v798 = vmul.f32 %v746, %v748
    %v799 = vmul.f32 %v749, 1.442695
    %v800 = vpow.pop %v799
    %v801 = vmul.f32 %v750, 1.442695
    %v802 = vpow.pop %v801
    %v803 = vmul.f32 %v751, 1.442695
    %v804 = vpow.pop %v803
    %v805 = vmul.f32 %v752, 1.442695
    %v806 = vpow.pop %v805
    %v807 = vmul.f32 %v753, 1.442695
    %v808 = vpow.pop %v807
    %v809 = vmul.f32 %v754, 1.442695
    %v810 = vpow.pop %v809
    %v811 = vmul.f32 %v755, 1.442695
    %v812 = vpow.pop %v811
    %v813 = vmul.f32 %v756, 1.442695
    %v814 = vpow.pop %v813
    %v815 = vmul.f32 %v757, 1.442695
    %v816 = vpow.pop %v815
    %v817 = vmul.f32 %v758, 1.442695
    %v818 = vpow.pop %v817
    %v819 = vmul.f32 %v759, 1.442695
    %v820 = vpow.pop %v819
    %v821 = vmul.f32 %v760, 1.442695
    %v822 = vpow.pop %v821
    %v823 = vmul.f32 %v761, 1.442695
    %v824 = vpow.pop %v823
    %v825 = vmul.f32 %v762, 1.442695
    %v826 = vpow.pop %v825
    %v827 = vmul.f32 %v763, 1.442695
    %v828 = vpow.pop %v827
    %v829 = vmul.f32 %v764, 1.442695
    %v830 = vpow.pop %v829
    %v831 = vmul.f32 %v765, 1.442695
    %v832 = vpow.pop %v831
    %v833 = vmul.f32 %v766, 1.442695
    %v834 = vpow.pop %v833
    %v835 = vmul.f32 %v767, 1.442695
    %v836 = vpow.pop %v835
    %v837 = vmul.f32 %v768, 1.442695
    %v838 = vpow.pop %v837
    %v839 = vmul.f32 %v769, 1.442695
    %v840 = vpow.pop %v839
    %v841 = vmul.f32 %v770, 1.442695
    %v842 = vpow.pop %v841
    %v843 = vmul.f32 %v771, 1.442695
    %v844 = vpow.pop %v843
    %v845 = vmul.f32 %v772, 1.442695
    %v846 = vpow.pop %v845
    %v847 = vmul.f32 %v773, 1.442695
    %v848 = vpow.pop %v847
    %v849 = vmul.f32 %v774, 1.442695
    %v850 = vpow.pop %v849
    %v851 = vmul.f32 %v775, 1.442695
    %v852 = vpow.pop %v851
    %v853 = vmul.f32 %v776, 1.442695
    %v854 = vpow.pop %v853
    %v855 = vmul.f32 %v777, 1.442695
    %v856 = vpow.pop %v855
    %v857 = vmul.f32 %v778, 1.442695
    %v858 = vpow.pop %v857
    %v859 = vmul.f32 %v779, 1.442695
    %v860 = vpow.pop %v859
    %v861 = vmul.f32 %v780, 1.442695
    %v862 = vpow.pop %v861
    %v863 = vmul.f32 %v781, 1.442695
    %v864 = vpow.pop %v863
    %v865 = vmul.f32 %v782, 1.442695
    %v866 = vpow.pop %v865
    %v867 = vmul.f32 %v783, 1.442695
    %v868 = vpow.pop %v867
    %v869 = vmul.f32 %v784, 1.442695
    %v870 = vpow.pop %v869
    %v871 = vmul.f32 %v785, 1.442695
    %v872 = vpow.pop %v871
    %v873 = vmul.f32 %v786, 1.442695
    %v874 = vpow.pop %v873
    %v875 = vmul.f32 %v787, 1.442695
    %v876 = vpow.pop %v875
    %v877 = vmul.f32 %v788, 1.442695
    %v878 = vpow.pop %v877
    %v879 = vmul.f32 %v789, 1.442695
    %v880 = vpow.pop %v879
    %v881 = vmul.f32 %v790, 1.442695
    %v882 = vpow.pop %v881
    %v883 = vmul.f32 %v791, 1.442695
    %v884 = vpow.pop %v883
    %v885 = vmul.f32 %v792, 1.442695
    %v886 = vpow.pop %v885
    %v887 = vmul.f32 %v793, 1.442695
    %v888 = vpow.pop %v887
    %v889 = vmul.f32 %v794, 1.442695
    %v890 = vpow.pop %v889
    %v891 = vmul.f32 %v795, 1.442695
    %v892 = vpow.pop %v891
    %v893 = vmul.f32 %v796, 1.442695
    %v894 = vpow.pop %v893
    %v895 = vmul.f32 %v797, 1.442695
    %v896 = vpow.pop %v895
    %v897 = vmul.f32 %v798, 1.442695
    %v898 = vpow.pop %v897
    %v899 = vmul.f32 %v800, %v800
    %v900 = vmul.f32 %v802, %v802
    %v901 = vmul.f32 %v804, %v804
    %v902 = vmul.f32 %v806, %v806
    %v903 = vmul.f32 %v808, %v808
    %v904 = vmul.f32 %v810, %v810
    %v905 = vmul.f32 %v812, %v812
    %v906 = vmul.f32 %v814, %v814
    %v907 = vmul.f32 %v816, %v816
    %v908 = vmul.f32 %v818, %v818
    %v909 = vmul.f32 %v820, %v820
    %v910 = vmul.f32 %v822, %v822
    %v911 = vmul.f32 %v824, %v824
    %v912 = vmul.f32 %v826, %v826
    %v913 = vmul.f32 %v828, %v828
    %v914 = vmul.f32 %v830, %v830
    %v915 = vmul.f32 %v832, %v832
    %v916 = vmul.f32 %v834, %v834
    %v917 = vmul.f32 %v836, %v836
    %v918 = vmul.f32 %v838, %v838
    %v919 = vmul.f32 %v840, %v840
    %v920 = vmul.f32 %v842, %v842
    %v921 = vmul.f32 %v844, %v844
    %v922 = vmul.f32 %v846, %v846
    %v923 = vmul.f32 %v848, %v848
    %v924 = vmul.f32 %v850, %v850
    %v925 = vmul.f32 %v852, %v852
    %v926 = vmul.f32 %v854, %v854
    %v927 = vmul.f32 %v856, %v856
    %v928 = vmul.f32 %v858, %v858
    %v929 = vmul.f32 %v860, %v860
    %v930 = vmul.f32 %v862, %v862
    %v931 = vmul.f32 %v864, %v864
    %v932 = vmul.f32 %v866, %v866
    %v933 = vmul.f32 %v868, %v868
    %v934 = vmul.f32 %v870, %v870
    %v935 = vmul.f32 %v872, %v872
    %v936 = vmul.f32 %v874, %v874
    %v937 = vmul.f32 %v876, %v876
    %v938 = vmul.f32 %v878, %v878
    %v939 = vmul.f32 %v880, %v880
    %v940 = vmul.f32 %v882, %v882
    %v941 = vmul.f32 %v884, %v884
    %v942 = vmul.f32 %v886, %v886
    %v943 = vmul.f32 %v888, %v888
    %v944 = vmul.f32 %v890, %v890
    %v945 = vmul.f32 %v892, %v892
    %v946 = vmul.f32 %v894, %v894
    %v947 = vmul.f32 %v896, %v896
    %v948 = vmul.f32 %v898, %v898
    %v949 = vadd.f32 %v800, %v899
    %v950 = vadd.f32 %v802, %v900
    %v951 = vadd.f32 %v804, %v901
    %v952 = vadd.f32 %v806, %v902
    %v953 = vadd.f32 %v808, %v903
    %v954 = vadd.f32 %v810, %v904
    %v955 = vadd.f32 %v812, %v905
    %v956 = vadd.f32 %v814, %v906
    %v957 = vadd.f32 %v816, %v907
    %v958 = vadd.f32 %v818, %v908
    %v959 = vadd.f32 %v820, %v909
    %v960 = vadd.f32 %v822, %v910
    %v961 = vadd.f32 %v824, %v911
    %v962 = vadd.f32 %v826, %v912
    %v963 = vadd.f32 %v828, %v913
    %v964 = vadd.f32 %v830, %v914
    %v965 = vadd.f32 %v832, %v915
    %v966 = vadd.f32 %v834, %v916
    %v967 = vadd.f32 %v836, %v917
    %v968 = vadd.f32 %v838, %v918
    %v969 = vadd.f32 %v840, %v919
    %v970 = vadd.f32 %v842, %v920
    %v971 = vadd.f32 %v844, %v921
    %v972 = vadd.f32 %v846, %v922
    %v973 = vadd.f32 %v848, %v923
    %v974 = vadd.f32 %v850, %v924
    %v975 = vadd.f32 %v852, %v925
    %v976 = vadd.f32 %v854, %v926
    %v977 = vadd.f32 %v856, %v927
    %v978 = vadd.f32 %v858, %v928
    %v979 = vadd.f32 %v860, %v929
    %v980 = vadd.f32 %v862, %v930
    %v981 = vadd.f32 %v864, %v931
    %v982 = vadd.f32 %v866, %v932
    %v983 = vadd.f32 %v868, %v933
    %v984 = vadd.f32 %v870, %v934
    %v985 = vadd.f32 %v872, %v935
    %v986 = vadd.f32 %v874, %v936
    %v987 = vadd.f32 %v876, %v937
    %v988 = vadd.f32 %v878, %v938
    %v989 = vadd.f32 %v880, %v939
    %v990 = vadd.f32 %v882, %v940
    %v991 = vadd.f32 %v884, %v941
    %v992 = vadd.f32 %v886, %v942
    %v993 = vadd.f32 %v888, %v943
    %v994 = vadd.f32 %v890, %v944
    %v995 = vadd.f32 %v892, %v945
    %v996 = vadd.f32 %v894, %v946
    %v997 = vadd.f32 %v896, %v947
    %v998 = vadd.f32 %v898, %v948
    %v999 = vmul.f32 %v899, %v899
    %v1000 = vmul.f32 %v900, %v900
    %v1001 = vmul.f32 %v901, %v901
    %v1002 = vmul.f32 %v902, %v902
    %v1003 = vmul.f32 %v903, %v903
    %v1004 = vmul.f32 %v904, %v904
    %v1005 = vmul.f32 %v905, %v905
    %v1006 = vmul.f32 %v906, %v906
    %v1007 = vmul.f32 %v907, %v907
    %v1008 = vmul.f32 %v908, %v908
    %v1009 = vmul.f32 %v909, %v909
    %v1010 = vmul.f32 %v910, %v910
    %v1011 = vmul.f32 %v911, %v911
    %v1012 = vmul.f32 %v912, %v912
    %v1013 = vmul.f32 %v913, %v913
    %v1014 = vmul.f32 %v914, %v914
    %v1015 = vmul.f32 %v915, %v915
    %v1016 = vmul.f32 %v916, %v916
    %v1017 = vmul.f32 %v917, %v917
    %v1018 = vmul.f32 %v918, %v918
    %v1019 = vmul.f32 %v919, %v919
    %v1020 = vmul.f32 %v920, %v920
    %v1021 = vmul.f32 %v921, %v921
    %v1022 = vmul.f32 %v922, %v922
    %v1023 = vmul.f32 %v923, %v923
    %v1024 = vmul.f32 %v924, %v924
    %v1025 = vmul.f32 %v925, %v925
    %v1026 = vmul.f32 %v926, %v926
    %v1027 = vmul.f32 %v927, %v927
    %v1028 = vmul.f32 %v928, %v928
    %v1029 = vmul.f32 %v929, %v929
    %v1030 = vmul.f32 %v930, %v930
    %v1031 = vmul.f32 %v931, %v931
    %v1032 = vmul.f32 %v932, %v932
    %v1033 = vmul.f32 %v933, %v933
    %v1034 = vmul.f32 %v934, %v934
    %v1035 = vmul.f32 %v935, %v935
    %v1036 = vmul.f32 %v936, %v936
    %v1037 = vmul.f32 %v937, %v937
    %v1038 = vmul.f32 %v938, %v938
    %v1039 = vmul.f32 %v939, %v939
    %v1040 = vmul.f32 %v940, %v940
    %v1041 = vmul.f32 %v941, %v941
    %v1042 = vmul.f32 %v942, %v942
    %v1043 = vmul.f32 %v943, %v943
    %v1044 = vmul.f32 %v944, %v944
    %v1045 = vmul.f32 %v945, %v945
    %v1046 = vmul.f32 %v946, %v946
    %v1047 = vmul.f32 %v947, %v947
    %v1048 = vmul.f32 %v948, %v948
    %v1049 = vadd.f32 %v949, %v999
    %v1050 = vadd.f32 %v950, %v1000
    %v1051 = vadd.f32 %v951, %v1001
    %v1052 = vadd.f32 %v952, %v1002
    %v1053 = vadd.f32 %v953, %v1003
    %v1054 = vadd.f32 %v954, %v1004
    %v1055 = vadd.f32 %v955, %v1005
    %v1056 = vadd.f32 %v956, %v1006
    %v1057 = vadd.f32 %v957, %v1007
    %v1058 = vadd.f32 %v958, %v1008
    %v1059 = vadd.f32 %v959, %v1009
    %v1060 = vadd.f32 %v960, %v1010
    %v1061 = vadd.f32 %v961, %v1011
    %v1062 = vadd.f32 %v962, %v1012
    %v1063 = vadd.f32 %v963, %v1013
    %v1064 = vadd.f32 %v964, %v1014
    %v1065 = vadd.f32 %v965, %v1015
    %v1066 = vadd.f32 %v966, %v1016
    %v1067 = vadd.f32 %v967, %v1017
    %v1068 = vadd.f32 %v968, %v1018
    %v1069 = vadd.f32 %v969, %v1019
    %v1070 = vadd.f32 %v970, %v1020
    %v1071 = vadd.f32 %v971, %v1021
    %v1072 = vadd.f32 %v972, %v1022
    %v1073 = vadd.f32 %v973, %v1023
    %v1074 = vadd.f32 %v974, %v1024
    %v1075 = vadd.f32 %v975, %v1025
    %v1076 = vadd.f32 %v976, %v1026
    %v1077 = vadd.f32 %v977, %v1027
    %v1078 = vadd.f32 %v978, %v1028
    %v1079 = vadd.f32 %v979, %v1029
    %v1080 = vadd.f32 %v980, %v1030
    %v1081 = vadd.f32 %v981, %v1031
    %v1082 = vadd.f32 %v982, %v1032
    %v1083 = vadd.f32 %v983, %v1033
    %v1084 = vadd.f32 %v984, %v1034
    %v1085 = vadd.f32 %v985, %v1035
    %v1086 = vadd.f32 %v986, %v1036
    %v1087 = vadd.f32 %v987, %v1037
    %v1088 = vadd.f32 %v988, %v1038
    %v1089 = vadd.f32 %v989, %v1039
    %v1090 = vadd.f32 %v990, %v1040
    %v1091 = vadd.f32 %v991, %v1041
    %v1092 = vadd.f32 %v992, %v1042
    %v1093 = vadd.f32 %v993, %v1043
    %v1094 = vadd.f32 %v994, %v1044
    %v1095 = vadd.f32 %v995, %v1045
    %v1096 = vadd.f32 %v996, %v1046
    %v1097 = vadd.f32 %v997, %v1047
    %v1098 = vadd.f32 %v998, %v1048
    %v1099 = vmul.f32 %v999, %v999
    %v1100 = vmul.f32 %v1000, %v1000
    %v1101 = vmul.f32 %v1001, %v1001
    %v1102 = vmul.f32 %v1002, %v1002
    %v1103 = vmul.f32 %v1003, %v1003
    %v1104 = vmul.f32 %v1004, %v1004
    %v1105 = vmul.f32 %v1005, %v1005
    %v1106 = vmul.f32 %v1006, %v1006
    %v1107 = vmul.f32 %v1007, %v1007
    %v1108 = vmul.f32 %v1008, %v1008
    %v1109 = vmul.f32 %v1009, %v1009
    %v1110 = vmul.f32 %v1010, %v1010
    %v1111 = vmul.f32 %v1011, %v1011
    %v1112 = vmul.f32 %v1012, %v1012
    %v1113 = vmul.f32 %v1013, %v1013
    %v1114 = vmul.f32 %v1014, %v1014
    %v1115 = vmul.f32 %v1015, %v1015
    %v1116 = vmul.f32 %v1016, %v1016
    %v1117 = vmul.f32 %v1017, %v1017
    %v1118 = vmul.f32 %v1018, %v1018
    %v1119 = vmul.f32 %v1019, %v1019
    %v1120 = vmul.f32 %v1020, %v1020
    %v1121 = vmul.f32 %v1021, %v1021
    %v1122 = vmul.f32 %v1022, %v1022
    %v1123 = vmul.f32 %v1023, %v1023
    %v1124 = vmul.f32 %v1024, %v1024
    %v1125 = vmul.f32 %v1025, %v1025
    %v1126 = vmul.f32 %v1026, %v1026
    %v1127 = vmul.f32 %v1027, %v1027
    %v1128 = vmul.f32 %v1028, %v1028
    %v1129 = vmul.f32 %v1029, %v1029
    %v1130 = vmul.f32 %v1030, %v1030
    %v1131 = vmul.f32 %v1031, %v1031
    %v1132 = vmul.f32 %v1032, %v1032
    %v1133 = vmul.f32 %v1033, %v1033
    %v1134 = vmul.f32 %v1034, %v1034
    %v1135 = vmul.f32 %v1035, %v1035
    %v1136 = vmul.f32 %v1036, %v1036
    %v1137 = vmul.f32 %v1037, %v1037
    %v1138 = vmul.f32 %v1038, %v1038
    %v1139 = vmul.f32 %v1039, %v1039
    %v1140 = vmul.f32 %v1040, %v1040
    %v1141 = vmul.f32 %v1041, %v1041
    %v1142 = vmul.f32 %v1042, %v1042
    %v1143 = vmul.f32 %v1043, %v1043
    %v1144 = vmul.f32 %v1044, %v1044
    %v1145 = vmul.f32 %v1045, %v1045
    %v1146 = vmul.f32 %v1046, %v1046
    %v1147 = vmul.f32 %v1047, %v1047
    %v1148 = vmul.f32 %v1048, %v1048
    %v1149 = vadd.f32 %v1049, %v1099
    %v1150 = vadd.f32 %v1050, %v1100
    %v1151 = vadd.f32 %v1051, %v1101
    %v1152 = vadd.f32 %v1052, %v1102
    %v1153 = vadd.f32 %v1053, %v1103
    %v1154 = vadd.f32 %v1054, %v1104
    %v1155 = vadd.f32 %v1055, %v1105
    %v1156 = vadd.f32 %v1056, %v1106
    %v1157 = vadd.f32 %v1057, %v1107
    %v1158 = vadd.f32 %v1058, %v1108
    %v1159 = vadd.f32 %v1059, %v1109
    %v1160 = vadd.f32 %v1060, %v1110
    %v1161 = vadd.f32 %v1061, %v1111
    %v1162 = vadd.f32 %v1062, %v1112
    %v1163 = vadd.f32 %v1063, %v1113
    %v1164 = vadd.f32 %v1064, %v1114
    %v1165 = vadd.f32 %v1065, %v1115
    %v1166 = vadd.f32 %v1066, %v1116
    %v1167 = vadd.f32 %v1067, %v1117
    %v1168 = vadd.f32 %v1068, %v1118
    %v1169 = vadd.f32 %v1069, %v1119
    %v1170 = vadd.f32 %v1070, %v1120
    %v1171 = vadd.f32 %v1071, %v1121
    %v1172 = vadd.f32 %v1072, %v1122
    %v1173 = vadd.f32 %v1073, %v1123
    %v1174 = vadd.f32 %v1074, %v1124
    %v1175 = vadd.f32 %v1075, %v1125
    %v1176 = vadd.f32 %v1076, %v1126
    %v1177 = vadd.f32 %v1077, %v1127
    %v1178 = vadd.f32 %v1078, %v1128
    %v1179 = vadd.f32 %v1079, %v1129
    %v1180 = vadd.f32 %v1080, %v1130
    %v1181 = vadd.f32 %v1081, %v1131
    %v1182 = vadd.f32 %v1082, %v1132
    %v1183 = vadd.f32 %v1083, %v1133
    %v1184 = vadd.f32 %v1084, %v1134
    %v1185 = vadd.f32 %v1085, %v1135
    %v1186 = vadd.f32 %v1086, %v1136
    %v1187 = vadd.f32 %v1087, %v1137
    %v1188 = vadd.f32 %v1088, %v1138
    %v1189 = vadd.f32 %v1089, %v1139
    %v1190 = vadd.f32 %v1090, %v1140
    %v1191 = vadd.f32 %v1091, %v1141
    %v1192 = vadd.f32 %v1092, %v1142
    %v1193 = vadd.f32 %v1093, %v1143
    %v1194 = vadd.f32 %v1094, %v1144
    %v1195 = vadd.f32 %v1095, %v1145
    %v1196 = vadd.f32 %v1096, %v1146
    %v1197 = vadd.f32 %v1097, %v1147
    %v1198 = vadd.f32 %v1098, %v1148
    %v1199 = vmul.f32 %v1099, %v1099
    %v1200 = vmul.f32 %v1100, %v1100
    %v1201 = vmul.f32 %v1101, %v1101
    %v1202 = vmul.f32 %v1102, %v1102
    %v1203 = vmul.f32 %v1103, %v1103
    %v1204 = vmul.f32 %v1104, %v1104
    %v1205 = vmul.f32 %v1105, %v1105
    %v1206 = vmul.f32 %v1106, %v1106
    %v1207 = vmul.f32 %v1107, %v1107
    %v1208 = vmul.f32 %v1108, %v1108
    %v1209 = vmul.f32 %v1109, %v1109
    %v1210 = vmul.f32 %v1110, %v1110
    %v1211 = vmul.f32 %v1111, %v1111
    %v1212 = vmul.f32 %v1112, %v1112
    %v1213 = vmul.f32 %v1113, %v1113
    %v1214 = vmul.f32 %v1114, %v1114
    %v1215 = vmul.f32 %v1115, %v1115
    %v1216 = vmul.f32 %v1116, %v1116
    %v1217 = vmul.f32 %v1117, %v1117
    %v1218 = vmul.f32 %v1118, %v1118
    %v1219 = vmul.f32 %v1119, %v1119
    %v1220 = vmul.f32 %v1120, %v1120
    %v1221 = vmul.f32 %v1121, %v1121
    %v1222 = vmul.f32 %v1122, %v1122
    %v1223 = vmul.f32 %v1123, %v1123
    %v1224 = vmul.f32 %v1124, %v1124
    %v1225 = vmul.f32 %v1125, %v1125
    %v1226 = vmul.f32 %v1126, %v1126
    %v1227 = vmul.f32 %v1127, %v1127
    %v1228 = vmul.f32 %v1128, %v1128
    %v1229 = vmul.f32 %v1129, %v1129
    %v1230 = vmul.f32 %v1130, %v1130
    %v1231 = vmul.f32 %v1131, %v1131
    %v1232 = vmul.f32 %v1132, %v1132
    %v1233 = vmul.f32 %v1133, %v1133
    %v1234 = vmul.f32 %v1134, %v1134
    %v1235 = vmul.f32 %v1135, %v1135
    %v1236 = vmul.f32 %v1136, %v1136
    %v1237 = vmul.f32 %v1137, %v1137
    %v1238 = vmul.f32 %v1138, %v1138
    %v1239 = vmul.f32 %v1139, %v1139
    %v1240 = vmul.f32 %v1140, %v1140
    %v1241 = vmul.f32 %v1141, %v1141
    %v1242 = vmul.f32 %v1142, %v1142
    %v1243 = vmul.f32 %v1143, %v1143
    %v1244 = vmul.f32 %v1144, %v1144
    %v1245 = vmul.f32 %v1145, %v1145
    %v1246 = vmul.f32 %v1146, %v1146
    %v1247 = vmul.f32 %v1147, %v1147
    %v1248 = vmul.f32 %v1148, %v1148
    %v1249 = vadd.f32 %v1149, %v1199
    %v1250 = vadd.f32 %v1150, %v1200
    %v1251 = vadd.f32 %v1151, %v1201
    %v1252 = vadd.f32 %v1152, %v1202
    %v1253 = vadd.f32 %v1153, %v1203
    %v1254 = vadd.f32 %v1154, %v1204
    %v1255 = vadd.f32 %v1155, %v1205
    %v1256 = vadd.f32 %v1156, %v1206
    %v1257 = vadd.f32 %v1157, %v1207
    %v1258 = vadd.f32 %v1158, %v1208
    %v1259 = vadd.f32 %v1159, %v1209
    %v1260 = vadd.f32 %v1160, %v1210
    %v1261 = vadd.f32 %v1161, %v1211
    %v1262 = vadd.f32 %v1162, %v1212
    %v1263 = vadd.f32 %v1163, %v1213
    %v1264 = vadd.f32 %v1164, %v1214
    %v1265 = vadd.f32 %v1165, %v1215
    %v1266 = vadd.f32 %v1166, %v1216
    %v1267 = vadd.f32 %v1167, %v1217
    %v1268 = vadd.f32 %v1168, %v1218
    %v1269 = vadd.f32 %v1169, %v1219
    %v1270 = vadd.f32 %v1170, %v1220
    %v1271 = vadd.f32 %v1171, %v1221
    %v1272 = vadd.f32 %v1172, %v1222
    %v1273 = vadd.f32 %v1173, %v1223
    %v1274 = vadd.f32 %v1174, %v1224
    %v1275 = vadd.f32 %v1175, %v1225
    %v1276 = vadd.f32 %v1176, %v1226
    %v1277 = vadd.f32 %v1177, %v1227
    %v1278 = vadd.f32 %v1178, %v1228
    %v1279 = vadd.f32 %v1179, %v1229
    %v1280 = vadd.f32 %v1180, %v1230
    %v1281 = vadd.f32 %v1181, %v1231
    %v1282 = vadd.f32 %v1182, %v1232
    %v1283 = vadd.f32 %v1183, %v1233
    %v1284 = vadd.f32 %v1184, %v1234
    %v1285 = vadd.f32 %v1185, %v1235
    %v1286 = vadd.f32 %v1186, %v1236
    %v1287 = vadd.f32 %v1187, %v1237
    %v1288 = vadd.f32 %v1188, %v1238
    %v1289 = vadd.f32 %v1189, %v1239
    %v1290 = vadd.f32 %v1190, %v1240
    %v1291 = vadd.f32 %v1191, %v1241
    %v1292 = vadd.f32 %v1192, %v1242
    %v1293 = vadd.f32 %v1193, %v1243
    %v1294 = vadd.f32 %v1194, %v1244
    %v1295 = vadd.f32 %v1195, %v1245
    %v1296 = vadd.f32 %v1196, %v1246
    %v1297 = vadd.f32 %v1197, %v1247
    %v1298 = vadd.f32 %v1198, %v1248
    %1299 = vst [vmem:[#allocation4] sm:$0xff] %v1249
    %1300 = vst [vmem:[#allocation4 + $0x8] sm:$0xff] %v1250
    %1301 = vst [vmem:[#allocation4 + $0x10] sm:$0xff] %v1251
    %1302 = vst [vmem:[#allocation4 + $0x18] sm:$0xff] %v1252
    %1303 = vst [vmem:[#allocation4 + $0x20] sm:$0xff] %v1253
    %1304 = vst [vmem:[#allocation4 + $0x28] sm:$0xff] %v1254
    %1305 = vst [vmem:[#allocation4 + $0x30] sm:$0xff] %v1255
    %1306 = vst [vmem:[#allocation4 + $0x38] sm:$0xff] %v1256
    %1307 = vst [vmem:[#allocation4 + $0x40] sm:$0xff] %v1257
    %1308 = vst [vmem:[#allocation4 + $0x48] sm:$0xff] %v1258
    %1309 = vst [vmem:[#allocation4 + $0x50] sm:$0xff] %v1259
    %1310 = vst [vmem:[#allocation4 + $0x58] sm:$0xff] %v1260
    %1311 = vst [vmem:[#allocation4 + $0x60] sm:$0xff] %v1261
    %1312 = vst [vmem:[#allocation4 + $0x68] sm:$0xff] %v1262
    %1313 = vst [vmem:[#allocation4 + $0x70] sm:$0xff] %v1263
    %1314 = vst [vmem:[#allocation4 + $0x78] sm:$0xff] %v1264
    %1315 = vst [vmem:[#allocation4 + $0x80] sm:$0xff] %v1265
    %1316 = vst [vmem:[#allocation4 + $0x88] sm:$0xff] %v1266
    %1317 = vst [vmem:[#allocation4 + $0x90] sm:$0xff] %v1267
    %1318 = vst [vmem:[#allocation4 + $0x98] sm:$0xff] %v1268
    %1319 = vst [vmem:[#allocation4 + $0xa0] sm:$0xff] %v1269
    %1320 = vst [vmem:[#allocation4 + $0xa8] sm:$0xff] %v1270
    %1321 = vst [vmem:[#allocation4 + $0xb0] sm:$0xff] %v1271
    %1322 = vst [vmem:[#allocation4 + $0xb8] sm:$0xff] %v1272
    %1323 = vst [vmem:[#allocation4 + $0xc0] sm:$0xff] %v1273
    %1324 = vst [vmem:[#allocation4 + $0xc8] sm:$0xff] %v1274
    %1325 = vst [vmem:[#allocation4 + $0xd0] sm:$0xff] %v1275
    %1326 = vst [vmem:[#allocation4 + $0xd8] sm:$0xff] %v1276
    %1327 = vst [vmem:[#allocation4 + $0xe0] sm:$0xff] %v1277
    %1328 = vst [vmem:[#allocation4 + $0xe8] sm:$0xff] %v1278
    %1329 = vst [vmem:[#allocation4 + $0xf0] sm:$0xff] %v1279
    %1330 = vst [vmem:[#allocation4 + $0xf8] sm:$0xff] %v1280
    %1331 = vst [vmem:[#allocation4 + $0x100] sm:$0xff] %v1281
    %1332 = vst [vmem:[#allocation4 + $0x108] sm:$0xff] %v1282
    %1333 = vst [vmem:[#allocation4 + $0x110] sm:$0xff] %v1283
    %1334 = vst [vmem:[#allocation4 + $0x118] sm:$0xff] %v1284
    %1335 = vst [vmem:[#allocation4 + $0x120] sm:$0xff] %v1285
    %1336 = vst [vmem:[#allocation4 + $0x128] sm:$0xff] %v1286
    %1337 = vst [vmem:[#allocation4 + $0x130] sm:$0xff] %v1287
    %1338 = vst [vmem:[#allocation4 + $0x138] sm:$0xff] %v1288
    %1339 = vst [vmem:[#allocation4 + $0x140] sm:$0xff] %v1289
    %1340 = vst [vmem:[#allocation4 + $0x148] sm:$0xff] %v1290
    %1341 = vst [vmem:[#allocation4 + $0x150] sm:$0xff] %v1291
    %1342 = vst [vmem:[#allocation4 + $0x158] sm:$0xff] %v1292
    %1343 = vst [vmem:[#allocation4 + $0x160] sm:$0xff] %v1293
    %1344 = vst [vmem:[#allocation4 + $0x168] sm:$0xff] %v1294
    %1345 = vst [vmem:[#allocation4 + $0x170] sm:$0xff] %v1295
    %1346 = vst [vmem:[#allocation4 + $0x178] sm:$0xff] %v1296
    %1347 = vst [vmem:[#allocation4 + $0x180] sm:$0xff] %v1297
    %1348 = vst [vmem:[#allocation4 + $0x188] sm:$0xff] %v1298
    // Predicated region
    $region14: #{tpu_custom_call.1} parent=1 // pred_check
      _
    $region15: #{tpu_custom_call.1} parent=1 // pred_check_branch
      %1350 = sbr.rel (0) target = $region17
    $region16: #{tpu_custom_call.1} parent=1 // pred_region
      %1352 = vsyncadd [#allocation5], 0
      %s1353 = sshll.u32 [#allocation4], 4
      %s1354 = int_to_ptr.vmem [resolvable:$true] %s1353
      %s1355 = sshll.u32 %s4, 4
      %s1356 = int_to_ptr.hbm [resolvable:$true] %s1355
      %1361 = dma.vmem_to_hbm [thread:$0]  %s1354, 6400, %s1356, [#allocation5], 256, 256, 16
    $region17: #{tpu_custom_call.1} parent=1 // pred_fallthru
      _
    // Predicated region
    $region18: #{tpu_custom_call.1} parent=1 // pred_check
      _
    $region19: #{tpu_custom_call.1} parent=1 // pred_check_branch
      %1363 = sbr.rel (0) target = $region21
    $region20: #{tpu_custom_call.1} parent=1 // pred_region
      %1365 = dma.done [#allocation5], 6400
    $region21: #{tpu_custom_call.1} parent=1 // pred_fallthru
      _
    %1366 = vsyncpa [#allocation5], 1

</llo_original>
